<compile_context>
chip_gen: v5e
topology: v5e:2x2
jax: 0.10.0
libtpu: 0.0.40
codegen_flags: <defaults>
</compile_context>

<pallas_src>
import jax
import jax.numpy as jnp
from jax.experimental import pallas as pl
from jax.experimental.pallas import tpu as pltpu


def _dense_film_kernel(pos_ref, w_ref, b_ref, scale_ref, shift_ref):
    """Fused Mish + Linear + split.

    pos_ref:   (TB, C)   input tile (streamed)
    w_ref:     (C, 2C)   transposed PyTorch Linear weight (resident)
    b_ref:     (1, 2C)   bias (resident)
    scale_ref: (TB, C)   first half of the Linear output
    shift_ref: (TB, C)   second half of the Linear output
    """
    x = pos_ref[...].astype(jnp.float32)

    # Mish with a single transcendental:
    #   mish(x) = x * tanh(log(1 + e^x)) = x * (1 - 2 / ((1 + e^x)^2 + 1))
    u = 1.0 + jnp.exp(x)
    mish = x * (1.0 - 2.0 / (u * u + 1.0))

    y = jnp.dot(mish, w_ref[...].astype(jnp.float32),
                preferred_element_type=jnp.float32) + b_ref[...]

    C = scale_ref.shape[-1]
    scale_ref[...] = y[:, :C].astype(scale_ref.dtype)
    shift_ref[...] = y[:, C:].astype(shift_ref.dtype)


def dense_film(position, w_t, b, *, block_b=512):
    """position: (B, C); w_t: (C, 2C); b: (2C,).

    Returns (scale, shift), each (B, 1, C) — matching
    `rearrange(pos_encoding, 'b c -> b 1 c').chunk(2, dim=-1)`.
    """
    B, C = position.shape
    assert w_t.shape == (C, 2 * C)
    assert b.shape == (2 * C,)
    b2d = b.reshape(1, 2 * C)

    # Batch tile: either the whole batch (always a legal block shape) or a
    # sublane-aligned tile that amortizes per-grid-step overhead while keeping
    # double-buffered blocks + resident weight well inside v7x's 64 MiB VMEM.
    if B <= block_b:
        TB = B
    else:
        TB = (block_b // 8) * 8
    grid = (pl.cdiv(B, TB),)

    # VMEM budget: 2x(input tile) + 2x(two output tiles) + weight + bias, x2 headroom.
    vmem_bytes = (2 * TB * C + 2 * 2 * TB * C + C * 2 * C + 2 * C) * 4 * 2
    vmem_bytes = int(min(max(vmem_bytes, 16 << 20), 64 << 20))

    scale, shift = pl.pallas_call(
        _dense_film_kernel,
        out_shape=(
            jax.ShapeDtypeStruct((B, C), jnp.float32),
            jax.ShapeDtypeStruct((B, C), jnp.float32),
        ),
        grid=grid,
        in_specs=[
            pl.BlockSpec((TB, C), lambda i: (i, 0)),        # streamed batch tiles
            pl.BlockSpec((C, 2 * C), lambda i: (0, 0)),     # weight: resident
            pl.BlockSpec((1, 2 * C), lambda i: (0, 0)),     # bias: resident
        ],
        out_specs=(
            pl.BlockSpec((TB, C), lambda i: (i, 0)),
            pl.BlockSpec((TB, C), lambda i: (i, 0)),
        ),
        compiler_params=pltpu.CompilerParams(
            dimension_semantics=("parallel",),              # batch axis -> 2 TCs on v7x
            vmem_limit_bytes=vmem_bytes,
        ),
    )(position, w_t, b2d)

    # 'b c -> b 1 c' (free reshape; the chunk(2) split already happened in-kernel).
    return scale[:, None, :], shift[:, None, :]


def _reference(position, w_t, b):
    x = position.astype(jnp.float32)
    mish = x * jnp.tanh(jax.nn.softplus(x))
    y = mish @ w_t + b
    y = y[:, None, :]
    C = position.shape[-1]
    return y[..., :C], y[..., C:]


if __name__ == "__main__":
    B, C = 2, 32  # batch, embed_channels

    key = jax.random.PRNGKey(0)
    k_pos, k_w, k_b = jax.random.split(key, 3)

    position = jax.random.normal(k_pos, (B, C), dtype=jnp.float32)
    # Parameter init mimicking PyTorch Linear default (uniform +- 1/sqrt(C)).
    bound = 1.0 / (C ** 0.5)
    w = jax.random.uniform(k_w, (2 * C, C), minval=-bound, maxval=bound, dtype=jnp.float32)
    b = jax.random.uniform(k_b, (2 * C,), minval=-bound, maxval=bound, dtype=jnp.float32)
    w_t = w.T  # (C, 2C)

    scale, shift = dense_film(position, w_t, b)
    jax.block_until_ready((scale, shift))

    scale_ref, shift_ref = _reference(position, w_t, b)
    assert scale.shape == (B, 1, C) and shift.shape == (B, 1, C)
    assert jnp.allclose(scale, scale_ref, atol=1e-4, rtol=1e-4)
    assert jnp.allclose(shift, shift_ref, atol=1e-4, rtol=1e-4)

    print("KERNEL_OK")
</pallas_src>

<mosaic_0001>
module attributes {stable_mosaic.version = 11 : i64} {
  func.func @_dense_film_kernel(%arg0: i32, %arg1: memref<2x32xf32, #tpu.memory_space<vmem>>, %arg2: memref<32x64xf32, #tpu.memory_space<vmem>>, %arg3: memref<1x64xf32, #tpu.memory_space<vmem>>, %arg4: memref<2x32xf32, #tpu.memory_space<vmem>>, %arg5: memref<2x32xf32, #tpu.memory_space<vmem>>) attributes {dimension_semantics = [#tpu.dimension_semantics<parallel>], iteration_bounds = array<i64: 1>, scalar_prefetch = 0 : i64, scratch_operands = 0 : i64, tpu.core_type = #tpu.core_type<tc>, window_params = [{transform_indices = @transform_0, window_bounds = array<i64: 2, 32>}, {pipeline_mode = #tpu.pipeline_mode<synchronous>, transform_indices = @transform_1, window_bounds = array<i64: 32, 64>}, {pipeline_mode = #tpu.pipeline_mode<synchronous>, transform_indices = @transform_2, window_bounds = array<i64: 1, 64>}, {transform_indices = @transform_3, window_bounds = array<i64: 2, 32>}, {transform_indices = @transform_4, window_bounds = array<i64: 2, 32>}]} {
    %c0 = arith.constant 0 : index
    %c0_0 = arith.constant 0 : index
    %0 = vector.load %arg1[%c0, %c0_0] : memref<2x32xf32, #tpu.memory_space<vmem>>, vector<2x32xf32>
    %1 = math.exp %0 : vector<2x32xf32>
    %cst = arith.constant 1.000000e+00 : f32
    %2 = vector.broadcast %cst : f32 to vector<2x32xf32>
    %3 = arith.addf %2, %1 : vector<2x32xf32>
    %4 = arith.mulf %3, %3 : vector<2x32xf32>
    %cst_1 = arith.constant 1.000000e+00 : f32
    %5 = vector.broadcast %cst_1 : f32 to vector<2x32xf32>
    %6 = arith.addf %4, %5 : vector<2x32xf32>
    %cst_2 = arith.constant 2.000000e+00 : f32
    %7 = vector.broadcast %cst_2 : f32 to vector<2x32xf32>
    %8 = arith.divf %7, %6 : vector<2x32xf32>
    %cst_3 = arith.constant 1.000000e+00 : f32
    %9 = vector.broadcast %cst_3 : f32 to vector<2x32xf32>
    %10 = arith.subf %9, %8 : vector<2x32xf32>
    %11 = arith.mulf %0, %10 : vector<2x32xf32>
    %c0_4 = arith.constant 0 : index
    %c0_5 = arith.constant 0 : index
    %12 = vector.load %arg2[%c0_4, %c0_5] : memref<32x64xf32, #tpu.memory_space<vmem>>, vector<32x64xf32>
    %cst_6 = arith.constant dense<0.000000e+00> : vector<2x64xf32>
    %13 = tpu.matmul %11, %12, %cst_6 {dimension_numbers = #tpu.dot_dimension_numbers<[1], [0], [0], [1], [0, 0, 1, 1], [], []>} : vector<2x32xf32>, vector<32x64xf32>, vector<2x64xf32> -> vector<2x64xf32>
    %c0_7 = arith.constant 0 : index
    %c0_8 = arith.constant 0 : index
    %14 = vector.load %arg3[%c0_7, %c0_8] : memref<1x64xf32, #tpu.memory_space<vmem>>, vector<1x64xf32>
    %15 = vector.broadcast %14 : vector<1x64xf32> to vector<2x64xf32>
    %16 = arith.addf %13, %15 : vector<2x64xf32>
    %17 = vector.extract_strided_slice %16 {offsets = [0, 0], sizes = [2, 32], strides = [1, 1]} : vector<2x64xf32> to vector<2x32xf32>
    %c0_9 = arith.constant 0 : index
    %c0_10 = arith.constant 0 : index
    %18 = vector.load %arg4[%c0_9, %c0_10] : memref<2x32xf32, #tpu.memory_space<vmem>>, vector<2x32xf32>
    tpu.vector_store %arg4[%c0_9, %c0_10], %17 {strides = array<i32>} : memref<2x32xf32, #tpu.memory_space<vmem>>, vector<2x32xf32>,
    %19 = vector.extract_strided_slice %16 {offsets = [0, 32], sizes = [2, 32], strides = [1, 1]} : vector<2x64xf32> to vector<2x32xf32>
    %c0_11 = arith.constant 0 : index
    %c0_12 = arith.constant 0 : index
    %20 = vector.load %arg5[%c0_11, %c0_12] : memref<2x32xf32, #tpu.memory_space<vmem>>, vector<2x32xf32>
    tpu.vector_store %arg5[%c0_11, %c0_12], %19 {strides = array<i32>} : memref<2x32xf32, #tpu.memory_space<vmem>>, vector<2x32xf32>,
    return
  }
  func.func @transform_0(%arg0: i32) -> (i32, i32) {
    %c0_i32 = arith.constant 0 : i32
    %c0_i32_0 = arith.constant 0 : i32
    return %arg0, %c0_i32 : i32, i32
  }
  func.func @transform_1(%arg0: i32) -> (i32, i32) {
    %c0_i32 = arith.constant 0 : i32
    %c0_i32_0 = arith.constant 0 : i32
    %c0_i32_1 = arith.constant 0 : i32
    return %c0_i32, %c0_i32_0 : i32, i32
  }
  func.func @transform_2(%arg0: i32) -> (i32, i32) {
    %c0_i32 = arith.constant 0 : i32
    %c0_i32_0 = arith.constant 0 : i32
    %c0_i32_1 = arith.constant 0 : i32
    return %c0_i32, %c0_i32_0 : i32, i32
  }
  func.func @transform_3(%arg0: i32) -> (i32, i32) {
    %c0_i32 = arith.constant 0 : i32
    %c0_i32_0 = arith.constant 0 : i32
    return %arg0, %c0_i32 : i32, i32
  }
  func.func @transform_4(%arg0: i32) -> (i32, i32) {
    %c0_i32 = arith.constant 0 : i32
    %c0_i32_0 = arith.constant 0 : i32
    return %arg0, %c0_i32 : i32, i32
  }
}

</mosaic_0001>

<llo_original>
// kernel: tpu_custom_call.1
$region0: #{tpu_custom_call.1}
  #allocation0 [shape = 'u32[]', space=smem, size = 0x4, offset = 0x4, fixed_abs, tag = 'smem constant byte address 0x4 - core index']
  #allocation1 [shape = 'u32[72,128]{1,0:T(1,128)}', space=vmem, size = 0x9000, scoped, tag = 'internal scratch']
  %s0 = inlined_call_operand.hbm [shape: f32[2,32], index: 0, kind: input, shape index: {}]
  %s1 = inlined_call_operand.hbm [shape: f32[32,64], index: 1, kind: input, shape index: {}]
  %s2 = inlined_call_operand.vmem [shape: f32[1,64], index: 2, kind: input, shape index: {}]
  %s3 = inlined_call_operand.hbm [shape: f32[2,32], index: 3, kind: output, shape index: {0}]
  %s4 = inlined_call_operand.hbm [shape: f32[2,32], index: 4, kind: output, shape index: {1}]
  %5 = xla_tuple %s3, %s4
  %s6 = sld [smem:[#allocation0]]
  $region38: #{tpu_custom_call.1} parent=0
    _
  %s8 = ssub.s32 1, %s6
  %s9 = scalar_select 0, %s8, %s6
  $region1: #{tpu_custom_call.1} parent=0
    #allocation2 [shape = 'u8[1024]{0}', space=vmem, size = 0x400, scoped, tag = 'input window, operand 0, single buffered']
    #allocation3 [shape = 's32[1]{0}', space=sflag, size = 0x4, scoped, tag = 'scoped memory for tpu_custom_call.1']
    #allocation4 [shape = 's32[1]{0}', space=sflag, size = 0x4, scoped, tag = 'scoped memory for tpu_custom_call.1']
    #allocation5 [shape = 'u8[16384]{0}', space=vmem, size = 0x4000, scoped, tag = 'input window, operand 1, single buffered']
    #allocation6 [shape = 's32[1]{0}', space=sflag, size = 0x4, scoped, tag = 'scoped memory for tpu_custom_call.1']
    #allocation7 [shape = 'u8[1024]{0}', space=vmem, size = 0x400, scoped, tag = 'output window, operand 0, single buffered']
    #allocation8 [shape = 'u8[1024]{0}', space=vmem, size = 0x400, scoped, tag = 'output window, operand 1, single buffered']
    #allocation9 [shape = 's32[1]{0}', space=sflag, size = 0x4, scoped, tag = 'scoped memory for tpu_custom_call.1']
    %10 = vsyncpa [#allocation3], 0
    %11 = vsyncpa [#allocation6], 0
    %12 = vsyncpa [#allocation4], 0
    %13 = vsyncpa [#allocation9], 0
    // Predicated region
    $region2: #{tpu_custom_call.1} parent=1 // pred_check
      _
    $region3: #{tpu_custom_call.1} parent=1 // pred_check_branch
      %15 = sbr.rel (0) target = $region5
    $region4: #{tpu_custom_call.1} parent=1 // pred_region
      %17 = vsyncadd [#allocation3], 0
      %s19 = sshll.u32 %s0, 4
      %s20 = int_to_ptr.hbm [resolvable:$true] %s19
      %s21 = sshll.u32 [#allocation2], 4
      %s22 = int_to_ptr.vmem [resolvable:$true] %s21
      %24 = dma.hbm_to_vmem [thread:$0]  %s20, 32, %s22, [#allocation3]
    $region5: #{tpu_custom_call.1} parent=1 // pred_fallthru
      _
    // Predicated region
    $region6: #{tpu_custom_call.1} parent=1 // pred_check
      _
    $region7: #{tpu_custom_call.1} parent=1 // pred_check_branch
      %26 = sbr.rel (0) target = $region9
    $region8: #{tpu_custom_call.1} parent=1 // pred_region
      %28 = vsyncadd [#allocation6], 0
      %s29 = sshll.u32 %s1, 4
      %s30 = int_to_ptr.hbm [resolvable:$true] %s29
      %s31 = sshll.u32 [#allocation5], 4
      %s32 = int_to_ptr.vmem [resolvable:$true] %s31
      %37 = dma.hbm_to_vmem [thread:$0]  %s30, 512, %s32, [#allocation6], 128, 128, 8
    $region9: #{tpu_custom_call.1} parent=1 // pred_fallthru
      _
    // Predicated region
    $region10: #{tpu_custom_call.1} parent=1 // pred_check
      _
    $region11: #{tpu_custom_call.1} parent=1 // pred_check_branch
      %39 = sbr.rel (0) target = $region13
    $region12: #{tpu_custom_call.1} parent=1 // pred_region
      _
    $region13: #{tpu_custom_call.1} parent=1 // pred_fallthru
      _
    // Predicated region
    $region14: #{tpu_custom_call.1} parent=1 // pred_check
      _
    $region15: #{tpu_custom_call.1} parent=1 // pred_check_branch
      %41 = sbr.rel (0) target = $region17
    $region16: #{tpu_custom_call.1} parent=1 // pred_region
      %43 = dma.done [#allocation3], 32
    $region17: #{tpu_custom_call.1} parent=1 // pred_fallthru
      _
    // Predicated region
    $region18: #{tpu_custom_call.1} parent=1 // pred_check
      _
    $region19: #{tpu_custom_call.1} parent=1 // pred_check_branch
      %45 = sbr.rel (0) target = $region21
    $region20: #{tpu_custom_call.1} parent=1 // pred_region
      %47 = dma.done [#allocation6], 512
    $region21: #{tpu_custom_call.1} parent=1 // pred_fallthru
      _
    %v48 = vld [vmem:[#allocation2] sm:$0x3]
    %v49 = vmul.f32 %v48, 1.442695
    %v50 = vpow.pop %v49
    %v51 = vadd.f32 %v50, 1.0
    %v52 = vmul.f32 %v51, %v51
    %v53 = vadd.f32 %v52, 1.0
    %v54 = vrcp.pop %v53
    %v55 = vmul.f32 %v53, %v54
    %v56 = vsub.f32 1.0, %v55
    %v57 = vmul.f32 %v54, %v56
    %v58 = vadd.f32 %v54, %v57
    %vm59 = vweird.f32 %v53
    %vm60 = vweird.f32 %v54
    %vm61 = vmor %vm59, %vm60
    %v62 = vsel %vm61, %v54, %v58
    %v63 = vand.u32 2147483647, %v53
    %vm64 = vcmp.eq.f32.partialorder %v63, 8.507059e+37
    %v65 = vand.u32 %v53, 2147483648
    %v66 = vor.u32 1.1754944e-38, %v65
    %v67 = vsel %vm64, %v66, %v62
    %v68 = vmul.f32 2.0, %v67
    %v69 = vsub.f32 1.0, %v68
    %v70 = vmul.f32 %v48, %v69
    %v71 = vld [vmem:[#allocation5] sm:$0xff]
    %v72 = vld [vmem:[#allocation5 + $0x8] sm:$0xff]
    %v73 = vld [vmem:[#allocation5 + $0x10] sm:$0xff]
    %v74 = vld [vmem:[#allocation5 + $0x18] sm:$0xff]
    %v75 = vld [vmem:[%s2] sm:$0x1]
    %v77 = vperm.slane %v75, 0
    %vm79 = vcmask 261120
    %v81 = vsel %vm79, %v70, 0
    %83 = vmatpush.msra.mxu0 0.0
    %84 = vmatpush.msra.mxu0 0.0
    %85 = vmatpush.msra.mxu0 0.0
    %86 = vmatpush.msra.mxu0 0.0
    %87 = vmatpush.msra.mxu0 0.0
    %88 = vmatpush.msra.mxu0 0.0
    %89 = vmatpush.msra.mxu0 0.0
    %90 = vmatpush.msra.mxu0 0.0
    %91 = vmatpush.msra.mxu0 0.0
    %92 = vmatpush.msra.mxu0 0.0
    %93 = vmatpush.msra.mxu0 0.0
    %94 = vmatpush.msra.mxu0 0.0
    %95 = vmatpush.msra.mxu0 %v74
    %96 = vmatpush.msra.mxu0 %v73
    %97 = vmatpush.msra.mxu0 %v72
    %98 = vmatpush.msra.mxu0 %v71
    %99 = vmatmul.f32.gmra.mxu0 %v81
    %v100 = vpop.f32.mrf.mxu0
    %v101 = vadd.f32 %v77, %v100
    %102 = vdwg.mxu0
    %vm103 = vcmask 254976
    %104 = vst.msk [vmem:[#allocation7] sm:$0x3] %vm103, %v101
    %106 = vrot.lane.b32.xlu0 %v101, 96
    %v107 = vpop.permute.xlu0 %106
    %109 = vst.msk [vmem:[#allocation8] sm:$0x3] %vm103, %v107
    // Predicated region
    $region22: #{tpu_custom_call.1} parent=1 // pred_check
      _
    $region23: #{tpu_custom_call.1} parent=1 // pred_check_branch
      %111 = sbr.rel (0) target = $region25
    $region24: #{tpu_custom_call.1} parent=1 // pred_region
      %113 = vsyncadd [#allocation4], 0
      %s115 = sshll.u32 [#allocation7], 4
      %s116 = int_to_ptr.vmem [resolvable:$true] %s115
      %s117 = sshll.u32 %s3, 4
      %s118 = int_to_ptr.hbm [resolvable:$true] %s117
      %120 = dma.vmem_to_hbm [thread:$0]  %s116, 32, %s118, [#allocation4]
    $region25: #{tpu_custom_call.1} parent=1 // pred_fallthru
      _
    // Predicated region
    $region26: #{tpu_custom_call.1} parent=1 // pred_check
      _
    $region27: #{tpu_custom_call.1} parent=1 // pred_check_branch
      %122 = sbr.rel (0) target = $region29
    $region28: #{tpu_custom_call.1} parent=1 // pred_region
      %124 = vsyncadd [#allocation9], 0
      %s126 = sshll.u32 [#allocation8], 4
      %s127 = int_to_ptr.vmem [resolvable:$true] %s126
      %s128 = sshll.u32 %s4, 4
      %s129 = int_to_ptr.hbm [resolvable:$true] %s128
      %131 = dma.vmem_to_hbm [thread:$0]  %s127, 32, %s129, [#allocation9]
    $region29: #{tpu_custom_call.1} parent=1 // pred_fallthru
      _
    // Predicated region
    $region30: #{tpu_custom_call.1} parent=1 // pred_check
      _
    $region31: #{tpu_custom_call.1} parent=1 // pred_check_branch
      %133 = sbr.rel (0) target = $region33
    $region32: #{tpu_custom_call.1} parent=1 // pred_region
      %135 = dma.done [#allocation4], 32
    $region33: #{tpu_custom_call.1} parent=1 // pred_fallthru
      _
    // Predicated region
    $region34: #{tpu_custom_call.1} parent=1 // pred_check
      _
    $region35: #{tpu_custom_call.1} parent=1 // pred_check_branch
      %137 = sbr.rel (0) target = $region37
    $region36: #{tpu_custom_call.1} parent=1 // pred_region
      %139 = dma.done [#allocation9], 32
    $region37: #{tpu_custom_call.1} parent=1 // pred_fallthru
      _
    %140 = vsyncpa [#allocation3], 1
    %141 = vsyncpa [#allocation6], 1
    %142 = vsyncpa [#allocation4], 1
    %143 = vsyncpa [#allocation9], 1

</llo_original>
